<compile_context>
chip_gen: v7x
topology: tpu7x:2x2x1
jax: 0.10.0
libtpu: 0.0.40
codegen_flags: <defaults>
</compile_context>

<pallas_src>
import functools

import jax
import jax.numpy as jnp
from jax.experimental import pallas as pl
from jax.experimental.pallas import tpu as pltpu


def _channel_attention_kernel(x_ref, w1_ref, w2_ref, o_ref, sum_acc, max_acc, *, inv_hw):
    # x_ref:  (1, C, THW)   one batch element, one spatial tile (C on sublane, pixels on lane)
    # w1_ref: (hidden, C)   Conv2d(C, hidden, 1).weight reshaped
    # w2_ref: (C, hidden)   Conv2d(hidden, C, 1).weight reshaped
    # o_ref:  (1, C, 1)
    # sum_acc/max_acc: (C, 1) f32 running pooling accumulators
    t = pl.program_id(1)

    @pl.when(t == 0)
    def _():
        sum_acc[...] = jnp.zeros_like(sum_acc)
        max_acc[...] = jnp.full_like(max_acc, -jnp.inf)

    x = x_ref[0].astype(jnp.float32)                               # (C, THW)
    sum_acc[...] += jnp.sum(x, axis=-1, keepdims=True)             # (C, 1)
    max_acc[...] = jnp.maximum(max_acc[...], jnp.max(x, axis=-1, keepdims=True))

    @pl.when(t == pl.num_programs(1) - 1)
    def _():
        avg = sum_acc[...] * inv_hw                                # (C, 1)
        mx = max_acc[...]                                          # (C, 1)
        w1 = w1_ref[...].astype(jnp.float32)                       # (hidden, C)
        w2 = w2_ref[...].astype(jnp.float32)                       # (C, hidden)
        # fc(avg) + fc(mx) == W2 @ (relu(W1 @ avg) + relu(W1 @ mx))   (fc2 is linear)
        h = (jnp.maximum(jnp.dot(w1, avg, preferred_element_type=jnp.float32), 0.0)
             + jnp.maximum(jnp.dot(w1, mx, preferred_element_type=jnp.float32), 0.0))  # (hidden,1)
        z = jnp.dot(w2, h, preferred_element_type=jnp.float32)     # (C, 1)
        o_ref[0] = (1.0 / (1.0 + jnp.exp(-z))).astype(o_ref.dtype)


def _choose_hw_tile(hw, c, itemsize):
    """Spatial (lane-axis) tile: divides hw, multiple of 128 (or == hw), ~<=4 MiB per buffer."""
    budget = 4 * 1024 * 1024
    max_tile = max(128, min(hw, budget // max(1, c * itemsize)))
    if hw <= max_tile:
        return hw
    t = (max_tile // 128) * 128
    while t >= 128:
        if hw % t == 0:
            return t
        t -= 128
    return hw  # fallback: whole row per step


def channel_attention(x_nchw, w1_oihw, w2_oihw):
    """x_nchw: (N, C, H, W); w1_oihw: (C//16, C, 1, 1); w2_oihw: (C, C//16, 1, 1)."""
    N, C, H, W = x_nchw.shape
    hidden = w1_oihw.shape[0]
    assert w1_oihw.shape == (hidden, C, 1, 1)
    assert w2_oihw.shape == (C, hidden, 1, 1)

    HW = H * W
    x3 = x_nchw.reshape(N, C, HW)                 # free reshape (no transpose)
    w1 = w1_oihw.reshape(hidden, C)               # free reshape
    w2 = w2_oihw.reshape(C, hidden)               # free reshape

    thw = _choose_hw_tile(HW, C, x_nchw.dtype.itemsize)
    num_t = HW // thw                             # thw always divides HW by construction

    kernel = functools.partial(_channel_attention_kernel, inv_hw=1.0 / HW)

    out = pl.pallas_call(
        kernel,
        out_shape=jax.ShapeDtypeStruct((N, C, 1), x_nchw.dtype),
        grid_spec=pltpu.PrefetchScalarGridSpec(
            num_scalar_prefetch=0,
            grid=(N, num_t),
            in_specs=[
                pl.BlockSpec((1, C, thw), lambda n, t: (n, 0, t)),
                pl.BlockSpec((hidden, C), lambda n, t: (0, 0)),
                pl.BlockSpec((C, hidden), lambda n, t: (0, 0)),
            ],
            out_specs=pl.BlockSpec((1, C, 1), lambda n, t: (n, 0, 0)),
            scratch_shapes=[
                pltpu.VMEM((C, 1), jnp.float32),   # running sum
                pltpu.VMEM((C, 1), jnp.float32),   # running max
            ],
        ),
        compiler_params=pltpu.CompilerParams(
            dimension_semantics=("parallel", "arbitrary")),
    )(x3, w1, w2)

    return out.reshape(N, C, 1, 1)


def _reference(x_nchw, w1, w2):
    # Pure-JAX reference matching the PyTorch module.
    avg = jnp.mean(x_nchw, axis=(2, 3))                       # (N, C)
    mx = jnp.max(x_nchw, axis=(2, 3))                         # (N, C)

    def fc(v):
        h = jnp.maximum(v @ w1.T, 0.0)                        # (N, hidden)
        return h @ w2.T                                       # (N, C)

    out = jax.nn.sigmoid(fc(avg) + fc(mx))
    return out[:, :, None, None]


if __name__ == "__main__":
    key = jax.random.PRNGKey(0)
    k1, k2, k3 = jax.random.split(key, 3)

    # inchs must be >= 16 so that inchs // 16 >= 1 (as the module hard-codes //16)
    N, C, H, W = 2, 64, 16, 16
    hidden = C // 16

    x = jax.random.normal(k1, (N, C, H, W), dtype=jnp.float32)
    w1 = jax.random.normal(k2, (hidden, C, 1, 1), dtype=jnp.float32) * 0.1
    w2 = jax.random.normal(k3, (C, hidden, 1, 1), dtype=jnp.float32) * 0.1

    out = channel_attention(x, w1, w2)
    out = jax.block_until_ready(out)

    ref = _reference(x, w1.reshape(hidden, C), w2.reshape(C, hidden))
    ref = jax.block_until_ready(ref)

    assert out.shape == (N, C, 1, 1), out.shape
    assert jnp.allclose(out, ref, atol=1e-5, rtol=1e-4), "mismatch vs reference"

    print("KERNEL_OK")
</pallas_src>

<mosaic_0001>
module attributes {stable_mosaic.version = 11 : i64} {
  func.func @_channel_attention_kernel(%arg0: i32, %arg1: i32, %arg2: memref<1x64x256xf32, #tpu.memory_space<vmem>>, %arg3: memref<4x64xf32, #tpu.memory_space<vmem>>, %arg4: memref<64x4xf32, #tpu.memory_space<vmem>>, %arg5: memref<1x64x1xf32, #tpu.memory_space<vmem>>, %arg6: memref<64x1xf32, #tpu.memory_space<vmem>>, %arg7: memref<64x1xf32, #tpu.memory_space<vmem>>) attributes {dimension_semantics = [#tpu.dimension_semantics<parallel>, #tpu.dimension_semantics<arbitrary>], iteration_bounds = array<i64: 2, 1>, scalar_prefetch = 0 : i64, scratch_operands = 2 : i64, tpu.core_type = #tpu.core_type<tc>, window_params = [{transform_indices = @transform_0, window_bounds = array<i64: 1, 64, 256>}, {pipeline_mode = #tpu.pipeline_mode<synchronous>, transform_indices = @transform_1, window_bounds = array<i64: 4, 64>}, {pipeline_mode = #tpu.pipeline_mode<synchronous>, transform_indices = @transform_2, window_bounds = array<i64: 64, 4>}, {transform_indices = @transform_3, window_bounds = array<i64: 1, 64, 1>}]} {
    %c0_i32 = arith.constant 0 : i32
    %0 = arith.cmpi eq, %arg1, %c0_i32 : i32
    %1 = arith.extui %0 : i1 to i32
    %c0_i32_0 = arith.constant 0 : i32
    %2 = arith.cmpi ne, %1, %c0_i32_0 : i32
    scf.if %2 {
      %cst_14 = arith.constant 0.000000e+00 : f32
      %18 = vector.broadcast %cst_14 : f32 to vector<64x1xf32>
      %c0_15 = arith.constant 0 : index
      %c0_16 = arith.constant 0 : index
      %19 = vector.load %arg6[%c0_15, %c0_16] : memref<64x1xf32, #tpu.memory_space<vmem>>, vector<64x1xf32>
      tpu.vector_store %arg6[%c0_15, %c0_16], %18 {strides = array<i32>} : memref<64x1xf32, #tpu.memory_space<vmem>>, vector<64x1xf32>,
      %cst_17 = arith.constant 0xFF800000 : f32
      %20 = vector.broadcast %cst_17 : f32 to vector<64x1xf32>
      %c0_18 = arith.constant 0 : index
      %c0_19 = arith.constant 0 : index
      %21 = vector.load %arg7[%c0_18, %c0_19] : memref<64x1xf32, #tpu.memory_space<vmem>>, vector<64x1xf32>
      tpu.vector_store %arg7[%c0_18, %c0_19], %20 {strides = array<i32>} : memref<64x1xf32, #tpu.memory_space<vmem>>, vector<64x1xf32>,
    } else {
    }
    %c0 = arith.constant 0 : index
    %c0_1 = arith.constant 0 : index
    %c0_2 = arith.constant 0 : index
    %3 = vector.load %arg2[%c0, %c0_1, %c0_2] : memref<1x64x256xf32, #tpu.memory_space<vmem>>, vector<1x64x256xf32>
    %4 = vector.shape_cast %3 : vector<1x64x256xf32> to vector<64x256xf32>
    %c0_3 = arith.constant 0 : index
    %c0_4 = arith.constant 0 : index
    %5 = vector.load %arg6[%c0_3, %c0_4] : memref<64x1xf32, #tpu.memory_space<vmem>>, vector<64x1xf32>
    %cst = arith.constant dense<0.000000e+00> : vector<64xf32>
    %6 = vector.multi_reduction <add>, %4, %cst [1] : vector<64x256xf32> to vector<64xf32>
    %7 = vector.shape_cast %6 : vector<64xf32> to vector<64x1xf32>
    %8 = arith.addf %5, %7 : vector<64x1xf32>
    %c0_5 = arith.constant 0 : index
    %c0_6 = arith.constant 0 : index
    %9 = vector.load %arg6[%c0_5, %c0_6] : memref<64x1xf32, #tpu.memory_space<vmem>>, vector<64x1xf32>
    tpu.vector_store %arg6[%c0_5, %c0_6], %8 {strides = array<i32>} : memref<64x1xf32, #tpu.memory_space<vmem>>, vector<64x1xf32>,
    %c0_7 = arith.constant 0 : index
    %c0_8 = arith.constant 0 : index
    %10 = vector.load %arg7[%c0_7, %c0_8] : memref<64x1xf32, #tpu.memory_space<vmem>>, vector<64x1xf32>
    %cst_9 = arith.constant dense<0xFF800000> : vector<64xf32>
    %11 = vector.multi_reduction <maximumf>, %4, %cst_9 [1] : vector<64x256xf32> to vector<64xf32>
    %12 = vector.shape_cast %11 : vector<64xf32> to vector<64x1xf32>
    %13 = arith.maximumf %10, %12 : vector<64x1xf32>
    %c0_10 = arith.constant 0 : index
    %c0_11 = arith.constant 0 : index
    %14 = vector.load %arg7[%c0_10, %c0_11] : memref<64x1xf32, #tpu.memory_space<vmem>>, vector<64x1xf32>
    tpu.vector_store %arg7[%c0_10, %c0_11], %13 {strides = array<i32>} : memref<64x1xf32, #tpu.memory_space<vmem>>, vector<64x1xf32>,
    %c0_i32_12 = arith.constant 0 : i32
    %15 = arith.cmpi eq, %arg1, %c0_i32_12 : i32
    %16 = arith.extui %15 : i1 to i32
    %c0_i32_13 = arith.constant 0 : i32
    %17 = arith.cmpi ne, %16, %c0_i32_13 : i32
    scf.if %17 {
      %c0_14 = arith.constant 0 : index
      %c0_15 = arith.constant 0 : index
      %18 = vector.load %arg6[%c0_14, %c0_15] : memref<64x1xf32, #tpu.memory_space<vmem>>, vector<64x1xf32>
      %cst_16 = arith.constant 3.906250e-03 : f32
      %19 = vector.broadcast %cst_16 : f32 to vector<64x1xf32>
      %20 = arith.mulf %18, %19 : vector<64x1xf32>
      %c0_17 = arith.constant 0 : index
      %c0_18 = arith.constant 0 : index
      %21 = vector.load %arg7[%c0_17, %c0_18] : memref<64x1xf32, #tpu.memory_space<vmem>>, vector<64x1xf32>
      %c0_19 = arith.constant 0 : index
      %c0_20 = arith.constant 0 : index
      %22 = vector.load %arg3[%c0_19, %c0_20] : memref<4x64xf32, #tpu.memory_space<vmem>>, vector<4x64xf32>
      %c0_21 = arith.constant 0 : index
      %c0_22 = arith.constant 0 : index
      %23 = vector.load %arg4[%c0_21, %c0_22] : memref<64x4xf32, #tpu.memory_space<vmem>>, vector<64x4xf32>
      %cst_23 = arith.constant dense<0.000000e+00> : vector<4x1xf32>
      %24 = tpu.matmul %22, %20, %cst_23 {dimension_numbers = #tpu.dot_dimension_numbers<[1], [0], [0], [1], [0, 0, 1, 1], [], []>} : vector<4x64xf32>, vector<64x1xf32>, vector<4x1xf32> -> vector<4x1xf32>
      %cst_24 = arith.constant 0.000000e+00 : f32
      %25 = vector.broadcast %cst_24 : f32 to vector<4x1xf32>
      %26 = arith.maximumf %24, %25 : vector<4x1xf32>
      %cst_25 = arith.constant dense<0.000000e+00> : vector<4x1xf32>
      %27 = tpu.matmul %22, %21, %cst_25 {dimension_numbers = #tpu.dot_dimension_numbers<[1], [0], [0], [1], [0, 0, 1, 1], [], []>} : vector<4x64xf32>, vector<64x1xf32>, vector<4x1xf32> -> vector<4x1xf32>
      %cst_26 = arith.constant 0.000000e+00 : f32
      %28 = vector.broadcast %cst_26 : f32 to vector<4x1xf32>
      %29 = arith.maximumf %27, %28 : vector<4x1xf32>
      %30 = arith.addf %26, %29 : vector<4x1xf32>
      %cst_27 = arith.constant dense<0.000000e+00> : vector<64x1xf32>
      %31 = tpu.matmul %23, %30, %cst_27 {dimension_numbers = #tpu.dot_dimension_numbers<[1], [0], [0], [1], [0, 0, 1, 1], [], []>} : vector<64x4xf32>, vector<4x1xf32>, vector<64x1xf32> -> vector<64x1xf32>
      %cst_28 = arith.constant 0.000000e+00 : f32
      %32 = vector.broadcast %cst_28 : f32 to vector<64x1xf32>
      %33 = arith.subf %32, %31 : vector<64x1xf32>
      %34 = math.exp %33 : vector<64x1xf32>
      %cst_29 = arith.constant 1.000000e+00 : f32
      %35 = vector.broadcast %cst_29 : f32 to vector<64x1xf32>
      %36 = arith.addf %35, %34 : vector<64x1xf32>
      %cst_30 = arith.constant 1.000000e+00 : f32
      %37 = vector.broadcast %cst_30 : f32 to vector<64x1xf32>
      %38 = arith.divf %37, %36 : vector<64x1xf32>
      %c0_31 = arith.constant 0 : index
      %c0_32 = arith.constant 0 : index
      %c0_33 = arith.constant 0 : index
      %39 = vector.load %arg5[%c0_31, %c0_32, %c0_33] : memref<1x64x1xf32, #tpu.memory_space<vmem>>, vector<1x64x1xf32>
      %40 = vector.shape_cast %39 : vector<1x64x1xf32> to vector<64x1xf32>
      %41 = vector.shape_cast %38 : vector<64x1xf32> to vector<1x64x1xf32>
      tpu.vector_store %arg5[%c0_31, %c0_32, %c0_33], %41 {strides = array<i32>} : memref<1x64x1xf32, #tpu.memory_space<vmem>>, vector<1x64x1xf32>,
    } else {
    }
    return
  }
  func.func @transform_0(%arg0: i32, %arg1: i32) -> (i32, i32, i32) {
    %c0_i32 = arith.constant 0 : i32
    %c0_i32_0 = arith.constant 0 : i32
    return %arg0, %c0_i32, %arg1 : i32, i32, i32
  }
  func.func @transform_1(%arg0: i32, %arg1: i32) -> (i32, i32) {
    %c0_i32 = arith.constant 0 : i32
    %c0_i32_0 = arith.constant 0 : i32
    %c0_i32_1 = arith.constant 0 : i32
    return %c0_i32, %c0_i32_0 : i32, i32
  }
  func.func @transform_2(%arg0: i32, %arg1: i32) -> (i32, i32) {
    %c0_i32 = arith.constant 0 : i32
    %c0_i32_0 = arith.constant 0 : i32
    %c0_i32_1 = arith.constant 0 : i32
    return %c0_i32, %c0_i32_0 : i32, i32
  }
  func.func @transform_3(%arg0: i32, %arg1: i32) -> (i32, i32, i32) {
    %c0_i32 = arith.constant 0 : i32
    %c0_i32_0 = arith.constant 0 : i32
    %c0_i32_1 = arith.constant 0 : i32
    return %arg0, %c0_i32, %c0_i32_0 : i32, i32, i32
  }
}

</mosaic_0001>

<llo_original>
// kernel: tpu_custom_call.1
$region0: #{tpu_custom_call.1}
  #allocation0 [shape = 'u32[]', space=smem, size = 0x4, offset = 0x4, fixed_abs, tag = 'smem constant byte address 0x4 - core index']
  #allocation1 [shape = 'u32[144,128]{1,0:T(1,128)}', space=vmem, size = 0x12000, scoped, tag = 'internal scratch']
  #allocation2 [shape = 'f32[64,1]{1,0:T(8,128)}', space=vmem, size = 0x8000, scoped, tag = 'scratch operand']
  #allocation3 [shape = 'f32[64,1]{1,0:T(8,128)}', space=vmem, size = 0x8000, scoped, tag = 'scratch operand']
  %s0 = inlined_call_operand.hbm [shape: f32[2,64,256], index: 0, kind: input, shape index: {}]
  %s1 = inlined_call_operand.vmem [shape: f32[4,64], index: 1, kind: input, shape index: {}]
  %s2 = inlined_call_operand.vmem [shape: f32[64,4], index: 2, kind: input, shape index: {}]
  %s3 = inlined_call_operand.vmem [shape: f32[2,64,1], index: 3, kind: output, shape index: {}]
  %s4 = sld [smem:[#allocation0]]
  $region57: #{tpu_custom_call.1} parent=0
    _
  %s6 = ssub.s32 1, %s4
  %s7 = scalar_select 0, %s6, %s4
  $region1: #{tpu_custom_call.1} parent=0
    #allocation4 [shape = 'u8[131072]{0}', space=vmem, size = 0x20000, scoped, tag = 'input window, operand 0']
    #allocation5 [shape = 's32[2]{0}', space=sflag, size = 0x8, scoped, tag = 'scoped memory for tpu_custom_call.1']
    %8 = vsyncpa [#allocation5], 0
    %s9 = scalar_lea.sflag [#allocation5], 1
    %10 = vsyncpa %s9, 0
    loop: start=0, step=1, limit=4
    $region2: #{tpu_custom_call.1} parent=1 // loop_pre_header
      _
    $region3: #{tpu_custom_call.1} parent=1 // loop_header
      %s12 = sphi 0, %s16
      %p13 = scmp.ge.s32.totalorder %s12, 4
      %s19 = sphi 0, %s31
      %s20 = sphi 0, %s27
      %s21 = sphi 0, %s19
      %s22 = sphi 0, %s20
      %s23 = sphi 0, %s21
      %s24 = sphi 0, %s22
      %s36 = sphi 0, %s38
      %s39 = sphi 0, %s36
      %s40 = sphi 0, %s39
      %s56 = sphi 0, %s40
      %s60 = sphi 0, %s60
      %s62 = sphi 0, %s60
      %s63 = sphi 0, %s62
      %s77 = sphi 0, %s63
      %s81 = sphi 0, %s81
      %s83 = sphi 0, %s81
      %s84 = sphi 0, %s83
      %s98 = sphi 0, %s84
      %s104 = sphi 0, %s106
      %s107 = sphi 0, %s104
      %s108 = sphi 0, %s107
      %s124 = sphi 0, %s108
    $region4: #{tpu_custom_call.1} parent=1 // loop_header_branch
      %15 = sbr.rel (%p13) target = $region8
    $region5: #{tpu_custom_call.1} parent=1 // loop_body
      %s17 = ssub.s32 %s12, 1
      %s18 = ssub.s32 %s12, 2
      %s25 = sadd.s32 1, %s20
      %p26 = scmp.ge.s32.totalorder %s25, 1
      %s27 = scalar_select %p26, 0, %s25
      %s28 = sadd.s32 1, %s19
      %s29 = scalar_select %p26, %s28, %s19
      %p30 = scmp.ge.s32.totalorder %s29, 2
      %s31 = scalar_select %p30, 0, %s29
      %s32 = ssub.s32 %s19, %s31
      %s33 = ssub.s32 %s20, %s27
      %s34 = sor.u32 %s32, %s33
      %p35 = scmp.eq.s32.totalorder %s34, 0
      %s37 = sadd.s32 %s36, 1
      %s38 = scalar_select %p35, %s36, %s37
      %p41 = pneg %p35
      %p42 = scmp.eq.s32.totalorder %s12, 1
      %p43 = por %p41, %p42
      %p44 = scmp.ne.s32.totalorder %s36, %s39
      %p45 = scmp.eq.s32.totalorder %s12, 0
      %p46 = por %p44, %p45
      %p47 = scmp.ne.s32.totalorder %s36, %s39
      %p48 = scmp.eq.s32.totalorder %s17, 1
      %p49 = por %p47, %p48
      %p50 = scmp.ne.s32.totalorder %s39, %s40
      %p51 = scmp.eq.s32.totalorder %s17, 0
      %p52 = por %p50, %p51
      %p53 = scmp.ne.s32.totalorder %s39, %s40
      %p54 = scmp.eq.s32.totalorder %s18, 1
      %p55 = por %p53, %p54
      %p57 = scmp.ne.s32.totalorder %s40, %s56
      %p58 = scmp.eq.s32.totalorder %s18, 0
      %p59 = por %p57, %p58
      %s61 = sadd.s32 %s60, 1
      %p64 = scmp.eq.s32.totalorder %s12, 1
      %p65 = scmp.ne.s32.totalorder %s60, %s62
      %p66 = scmp.eq.s32.totalorder %s12, 0
      %p67 = por %p65, %p66
      %p68 = scmp.ne.s32.totalorder %s60, %s62
      %p69 = scmp.eq.s32.totalorder %s17, 1
      %p70 = por %p68, %p69
      %p71 = scmp.ne.s32.totalorder %s62, %s63
      %p72 = scmp.eq.s32.totalorder %s17, 0
      %p73 = por %p71, %p72
      %p74 = scmp.ne.s32.totalorder %s62, %s63
      %p75 = scmp.eq.s32.totalorder %s18, 1
      %p76 = por %p74, %p75
      %p78 = scmp.ne.s32.totalorder %s63, %s77
      %p79 = scmp.eq.s32.totalorder %s18, 0
      %p80 = por %p78, %p79
      %s82 = sadd.s32 %s81, 1
      %p85 = scmp.eq.s32.totalorder %s12, 1
      %p86 = scmp.ne.s32.totalorder %s81, %s83
      %p87 = scmp.eq.s32.totalorder %s12, 0
      %p88 = por %p86, %p87
      %p89 = scmp.ne.s32.totalorder %s81, %s83
      %p90 = scmp.eq.s32.totalorder %s17, 1
      %p91 = por %p89, %p90
      %p92 = scmp.ne.s32.totalorder %s83, %s84
      %p93 = scmp.eq.s32.totalorder %s17, 0
      %p94 = por %p92, %p93
      %p95 = scmp.ne.s32.totalorder %s83, %s84
      %p96 = scmp.eq.s32.totalorder %s18, 1
      %p97 = por %p95, %p96
      %p99 = scmp.ne.s32.totalorder %s84, %s98
      %p100 = scmp.eq.s32.totalorder %s18, 0
      %p101 = por %p99, %p100
      %s102 = ssub.s32 %s19, %s31
      %p103 = scmp.eq.s32.totalorder %s102, 0
      %s105 = sadd.s32 %s104, 1
      %s106 = scalar_select %p103, %s104, %s105
      %p109 = pneg %p103
      %p110 = scmp.eq.s32.totalorder %s12, 1
      %p111 = por %p109, %p110
      %p112 = scmp.ne.s32.totalorder %s104, %s107
      %p113 = scmp.eq.s32.totalorder %s12, 0
      %p114 = por %p112, %p113
      %p115 = scmp.ne.s32.totalorder %s104, %s107
      %p116 = scmp.eq.s32.totalorder %s17, 1
      %p117 = por %p115, %p116
      %p118 = scmp.ne.s32.totalorder %s107, %s108
      %p119 = scmp.eq.s32.totalorder %s17, 0
      %p120 = por %p118, %p119
      %p121 = scmp.ne.s32.totalorder %s107, %s108
      %p122 = scmp.eq.s32.totalorder %s18, 1
      %p123 = por %p121, %p122
      %p125 = scmp.ne.s32.totalorder %s108, %s124
      %p126 = scmp.eq.s32.totalorder %s18, 0
      %p127 = por %p125, %p126
      %p128 = scmp.le.s32.totalorder 1, %s12
      %p129 = scmp.lt.s32.totalorder %s12, 3
      %p130 = pnand %p128, %p129
      %p131 = pneg %p130
      // Predicated region
      $region9: #{tpu_custom_call.1} parent=5 // pred_check
        _
      $region10: #{tpu_custom_call.1} parent=5 // pred_check_branch
        %133 = sbr.rel (%p130) target = $region12
      $region11: #{tpu_custom_call.1} parent=5 // pred_region
        %s134 = ssub.s32 %s12, 1
        // Predicated region
        $region13: #{tpu_custom_call.1} parent=11 // pred_check
          %p135 = pneg %p73
        $region14: #{tpu_custom_call.1} parent=11 // pred_check_branch
          %137 = sbr.rel (%p135) target = $region16
        $region15: #{tpu_custom_call.1} parent=11 // pred_region
          _
        $region16: #{tpu_custom_call.1} parent=11 // pred_fallthru
          _
        // Predicated region
        $region17: #{tpu_custom_call.1} parent=11 // pred_check
          %p138 = pneg %p94
        $region18: #{tpu_custom_call.1} parent=11 // pred_check_branch
          %140 = sbr.rel (%p138) target = $region20
        $region19: #{tpu_custom_call.1} parent=11 // pred_region
          _
        $region20: #{tpu_custom_call.1} parent=11 // pred_fallthru
          _
      $region12: #{tpu_custom_call.1} parent=5 // pred_fallthru
        _
      %p141 = scmp.lt.s32.totalorder %s12, 2
      // Predicated region
      $region21: #{tpu_custom_call.1} parent=5 // pred_check
        %p142 = pneg %p141
      $region22: #{tpu_custom_call.1} parent=5 // pred_check_branch
        %144 = sbr.rel (%p142) target = $region24
      $region23: #{tpu_custom_call.1} parent=5 // pred_region
        // Predicated region
        $region25: #{tpu_custom_call.1} parent=23 // pred_check
          %p145 = pneg %p46
        $region26: #{tpu_custom_call.1} parent=23 // pred_check_branch
          %147 = sbr.rel (%p145) target = $region28
        $region27: #{tpu_custom_call.1} parent=23 // pred_region
          %s148 = sand.u32 %s36, 1
          %s149 = scalar_lea.sflag [#allocation5], %s148
          %s150 = sand.u32 %s36, 1
          %s151 = smul.addr %s150, 128
          %s152 = scalar_lea.vmem [#allocation4], %s151
          %s153 = smul.u32 2, %s20
          %s155 = ssub.s32 2048, 2048
          %156 = vsyncadd %s149, %s155
          %s157 = smul.addr %s19, 16
          %s158 = sadd.s32 %s153, %s157
          %s159 = smul.addr %s158, 128
          %s160 = scalar_lea.hbm %s0, %s159
          %s161 = sshll.u32 %s152, 4
          %s162 = int_to_ptr.vmem [resolvable:$true] %s161
          %167 = dma.hbm_to_vmem [thread:$0]  %s160, 2048, %s162, %s149, 256, 256, 16
        $region28: #{tpu_custom_call.1} parent=23 // pred_fallthru
          _
      $region24: #{tpu_custom_call.1} parent=5 // pred_fallthru
        _
      %p168 = scmp.le.s32.totalorder 1, %s12
      %p169 = scmp.lt.s32.totalorder %s12, 3
      %p170 = pnand %p168, %p169
      %p171 = pneg %p170
      // Predicated region
      $region29: #{tpu_custom_call.1} parent=5 // pred_check
        _
      $region30: #{tpu_custom_call.1} parent=5 // pred_check_branch
        %173 = sbr.rel (%p170) target = $region32
      $region31: #{tpu_custom_call.1} parent=5 // pred_region
        %s174 = ssub.s32 %s12, 1
        %s175 = sand.u32 %s39, 1
        %s176 = scalar_lea.sflag [#allocation5], %s175
        %s177 = sand.u32 %s39, 1
        %s178 = smul.addr %s177, 128
        %s179 = scalar_lea.vmem [#allocation4], %s178
        // Predicated region
        $region33: #{tpu_custom_call.1} parent=31 // pred_check
          %p180 = pneg %p52
        $region34: #{tpu_custom_call.1} parent=31 // pred_check_branch
          %182 = sbr.rel (%p180) target = $region36
        $region35: #{tpu_custom_call.1} parent=31 // pred_region
          %183 = dma.done %s176, 2048
        $region36: #{tpu_custom_call.1} parent=31 // pred_fallthru
          _
        %s184 = sand.u32 %s39, 1
        %s185 = scalar_lea.sflag [#allocation5], %s184
        %s186 = sand.u32 %s39, 1
        %s187 = smul.addr %s186, 128
        %s188 = scalar_lea.vmem [#allocation4], %s187
        %p189 = pneg %p52
        %p190 = pneg %p49
        %p191 = pneg %p73
        %p192 = pneg %p70
        %p193 = pneg %p94
        %p194 = pneg %p91
        %p195 = pneg %p120
        %p196 = pneg %p117
        %p197 = scmp.lt.s32.totalorder %s21, 1
        %s198 = scalar_select %p197, %s21, 1
        %s199 = smul.addr %s198, 8
        %s200 = smul.addr %s199, 8
        %s201 = scalar_lea.vmem %s3, %s200
        %s202 = smul.u32 2, %s22
        %p203 = scmp.lt.s32.totalorder %s21, 1
        %s204 = scalar_select %p203, %s21, 1
        %s205 = smul.addr %s204, 8
        %s206 = smul.addr %s205, 8
        %s207 = scalar_lea.vmem %s3, %s206
        %p208 = scmp.eq.s32.totalorder %s22, 0
        // Predicated region
        $region37: #{tpu_custom_call.1} parent=31 // pred_check
          %p209 = pneg %p208
        $region38: #{tpu_custom_call.1} parent=31 // pred_check_branch
          %211 = sbr.rel (%p209) target = $region40
        $region39: #{tpu_custom_call.1} parent=31 // pred_region
          %vm212 = vcmask 7168
          %213 = vst.msk [vmem:[#allocation2] sm:$0xff] %vm212, 0.0
          %214 = vst.msk [vmem:[#allocation2 + $0x8] sm:$0xff] %vm212, 0.0
          %215 = vst.msk [vmem:[#allocation2 + $0x10] sm:$0xff] %vm212, 0.0
          %216 = vst.msk [vmem:[#allocation2 + $0x18] sm:$0xff] %vm212, 0.0
          %217 = vst.msk [vmem:[#allocation2 + $0x20] sm:$0xff] %vm212, 0.0
          %218 = vst.msk [vmem:[#allocation2 + $0x28] sm:$0xff] %vm212, 0.0
          %219 = vst.msk [vmem:[#allocation2 + $0x30] sm:$0xff] %vm212, 0.0
          %220 = vst.msk [vmem:[#allocation2 + $0x38] sm:$0xff] %vm212, 0.0
          %221 = vst.msk [vmem:[#allocation3] sm:$0xff] %vm212, -inf
          %222 = vst.msk [vmem:[#allocation3 + $0x8] sm:$0xff] %vm212, -inf
          %223 = vst.msk [vmem:[#allocation3 + $0x10] sm:$0xff] %vm212, -inf
          %224 = vst.msk [vmem:[#allocation3 + $0x18] sm:$0xff] %vm212, -inf
          %225 = vst.msk [vmem:[#allocation3 + $0x20] sm:$0xff] %vm212, -inf
          %226 = vst.msk [vmem:[#allocation3 + $0x28] sm:$0xff] %vm212, -inf
          %227 = vst.msk [vmem:[#allocation3 + $0x30] sm:$0xff] %vm212, -inf
          %228 = vst.msk [vmem:[#allocation3 + $0x38] sm:$0xff] %vm212, -inf
        $region40: #{tpu_custom_call.1} parent=31 // pred_fallthru
          _
        %v229 = vld [vmem:[%s179] sm:$0xff]
        %v230 = vld [vmem:[%s179 + $0x8] sm:$0xff]
        %v231 = vld [vmem:[%s179 + $0x10] sm:$0xff]
        %v232 = vld [vmem:[%s179 + $0x18] sm:$0xff]
        %v233 = vld [vmem:[%s179 + $0x20] sm:$0xff]
        %v234 = vld [vmem:[%s179 + $0x28] sm:$0xff]
        %v235 = vld [vmem:[%s179 + $0x30] sm:$0xff]
        %v236 = vld [vmem:[%s179 + $0x38] sm:$0xff]
        %v237 = vld [vmem:[%s179 + $0x40] sm:$0xff]
        %v238 = vld [vmem:[%s179 + $0x48] sm:$0xff]
        %v239 = vld [vmem:[%s179 + $0x50] sm:$0xff]
        %v240 = vld [vmem:[%s179 + $0x58] sm:$0xff]
        %v241 = vld [vmem:[%s179 + $0x60] sm:$0xff]
        %v242 = vld [vmem:[%s179 + $0x68] sm:$0xff]
        %v243 = vld [vmem:[%s179 + $0x70] sm:$0xff]
        %v244 = vld [vmem:[%s179 + $0x78] sm:$0xff]
        %v245 = vld [vmem:[#allocation2] sm:$0xff]
        %v246 = vld [vmem:[#allocation2 + $0x8] sm:$0xff]
        %v247 = vld [vmem:[#allocation2 + $0x10] sm:$0xff]
        %v248 = vld [vmem:[#allocation2 + $0x18] sm:$0xff]
        %v249 = vld [vmem:[#allocation2 + $0x20] sm:$0xff]
        %v250 = vld [vmem:[#allocation2 + $0x28] sm:$0xff]
        %v251 = vld [vmem:[#allocation2 + $0x30] sm:$0xff]
        %v252 = vld [vmem:[#allocation2 + $0x38] sm:$0xff]
        %v253 = vadd.f32 %v229, %v230
        %254 = vadd.xlane.f32.xlu0 %v253
        %v255 = vpop.xlane.xlu0 %254
        %v256 = vadd.f32 %v231, %v232
        %257 = vadd.xlane.f32.xlu0 %v256
        %v258 = vpop.xlane.xlu0 %257
        %v259 = vadd.f32 %v233, %v234
        %260 = vadd.xlane.f32.xlu0 %v259
        %v261 = vpop.xlane.xlu0 %260
        %v262 = vadd.f32 %v235, %v236
        %263 = vadd.xlane.f32.xlu0 %v262
        %v264 = vpop.xlane.xlu0 %263
        %v265 = vadd.f32 %v237, %v238
        %266 = vadd.xlane.f32.xlu0 %v265
        %v267 = vpop.xlane.xlu0 %266
        %v268 = vadd.f32 %v239, %v240
        %269 = vadd.xlane.f32.xlu0 %v268
        %v270 = vpop.xlane.xlu0 %269
        %v271 = vadd.f32 %v241, %v242
        %272 = vadd.xlane.f32.xlu0 %v271
        %v273 = vpop.xlane.xlu0 %272
        %v274 = vadd.f32 %v243, %v244
        %275 = vadd.xlane.f32.xlu0 %v274
        %v276 = vpop.xlane.xlu0 %275
        %v277 = vadd.f32 %v245, %v255
        %v278 = vadd.f32 %v246, %v258
        %v279 = vadd.f32 %v247, %v261
        %v280 = vadd.f32 %v248, %v264
        %v281 = vadd.f32 %v249, %v267
        %v282 = vadd.f32 %v250, %v270
        %v283 = vadd.f32 %v251, %v273
        %v284 = vadd.f32 %v252, %v276
        %vm285 = vcmask 7168
        %286 = vst.msk [vmem:[#allocation2] sm:$0xff] %vm285, %v277
        %287 = vst.msk [vmem:[#allocation2 + $0x8] sm:$0xff] %vm285, %v278
        %288 = vst.msk [vmem:[#allocation2 + $0x10] sm:$0xff] %vm285, %v279
        %289 = vst.msk [vmem:[#allocation2 + $0x18] sm:$0xff] %vm285, %v280
        %290 = vst.msk [vmem:[#allocation2 + $0x20] sm:$0xff] %vm285, %v281
        %291 = vst.msk [vmem:[#allocation2 + $0x28] sm:$0xff] %vm285, %v282
        %292 = vst.msk [vmem:[#allocation2 + $0x30] sm:$0xff] %vm285, %v283
        %293 = vst.msk [vmem:[#allocation2 + $0x38] sm:$0xff] %vm285, %v284
        %v294 = vld [vmem:[#allocation3] sm:$0xff]
        %v295 = vld [vmem:[#allocation3 + $0x8] sm:$0xff]
        %v296 = vld [vmem:[#allocation3 + $0x10] sm:$0xff]
        %v297 = vld [vmem:[#allocation3 + $0x18] sm:$0xff]
        %v298 = vld [vmem:[#allocation3 + $0x20] sm:$0xff]
        %v299 = vld [vmem:[#allocation3 + $0x28] sm:$0xff]
        %v300 = vld [vmem:[#allocation3 + $0x30] sm:$0xff]
        %v301 = vld [vmem:[#allocation3 + $0x38] sm:$0xff]
        %v302 = vmax.f32 %v229, %v230
        %303 = vmax.xlane.f32.xlu0 %v302
        %v304 = vpop.xlane.xlu0 %303
        %v305 = vmax.f32 %v231, %v232
        %306 = vmax.xlane.f32.xlu0 %v305
        %v307 = vpop.xlane.xlu0 %306
        %v308 = vmax.f32 %v233, %v234
        %309 = vmax.xlane.f32.xlu0 %v308
        %v310 = vpop.xlane.xlu0 %309
        %v311 = vmax.f32 %v235, %v236
        %312 = vmax.xlane.f32.xlu0 %v311
        %v313 = vpop.xlane.xlu0 %312
        %v314 = vmax.f32 %v237, %v238
        %315 = vmax.xlane.f32.xlu0 %v314
        %v316 = vpop.xlane.xlu0 %315
        %v317 = vmax.f32 %v239, %v240
        %318 = vmax.xlane.f32.xlu0 %v317
        %v319 = vpop.xlane.xlu0 %318
        %v320 = vmax.f32 %v241, %v242
        %321 = vmax.xlane.f32.xlu0 %v320
        %v322 = vpop.xlane.xlu0 %321
        %v323 = vmax.f32 %v243, %v244
        %324 = vmax.xlane.f32.xlu0 %v323
        %v325 = vpop.xlane.xlu0 %324
        %v326 = vmax.f32 %v294, %v304
        %v327 = vmax.f32 %v295, %v307
        %v328 = vmax.f32 %v296, %v310
        %v329 = vmax.f32 %v297, %v313
        %v330 = vmax.f32 %v298, %v316
        %v331 = vmax.f32 %v299, %v319
        %v332 = vmax.f32 %v300, %v322
        %v333 = vmax.f32 %v301, %v325
        %334 = vst.msk [vmem:[#allocation3] sm:$0xff] %vm285, %v326
        %335 = vst.msk [vmem:[#allocation3 + $0x8] sm:$0xff] %vm285, %v327
        %336 = vst.msk [vmem:[#allocation3 + $0x10] sm:$0xff] %vm285, %v328
        %337 = vst.msk [vmem:[#allocation3 + $0x18] sm:$0xff] %vm285, %v329
        %338 = vst.msk [vmem:[#allocation3 + $0x20] sm:$0xff] %vm285, %v330
        %339 = vst.msk [vmem:[#allocation3 + $0x28] sm:$0xff] %vm285, %v331
        %340 = vst.msk [vmem:[#allocation3 + $0x30] sm:$0xff] %vm285, %v332
        %341 = vst.msk [vmem:[#allocation3 + $0x38] sm:$0xff] %vm285, %v333
        // Predicated region
        $region41: #{tpu_custom_call.1} parent=31 // pred_check
          %p342 = pneg %p208
        $region42: #{tpu_custom_call.1} parent=31 // pred_check_branch
          %344 = sbr.rel (%p342) target = $region44
        $region43: #{tpu_custom_call.1} parent=31 // pred_region
          %v345 = vld [vmem:[#allocation2] sm:$0xff]
          %v346 = vld [vmem:[#allocation2 + $0x8] sm:$0xff]
          %v347 = vld [vmem:[#allocation2 + $0x10] sm:$0xff]
          %v348 = vld [vmem:[#allocation2 + $0x18] sm:$0xff]
          %v349 = vld [vmem:[#allocation2 + $0x20] sm:$0xff]
          %v350 = vld [vmem:[#allocation2 + $0x28] sm:$0xff]
          %v351 = vld [vmem:[#allocation2 + $0x30] sm:$0xff]
          %v352 = vld [vmem:[#allocation2 + $0x38] sm:$0xff]
          %v353 = vmul.f32 %v345, 0.00390625
          %v354 = vmul.f32 %v346, 0.00390625
          %v355 = vmul.f32 %v347, 0.00390625
          %v356 = vmul.f32 %v348, 0.00390625
          %v357 = vmul.f32 %v349, 0.00390625
          %v358 = vmul.f32 %v350, 0.00390625
          %v359 = vmul.f32 %v351, 0.00390625
          %v360 = vmul.f32 %v352, 0.00390625
          %v361 = vld [vmem:[#allocation3] sm:$0xff]
          %v362 = vld [vmem:[#allocation3 + $0x8] sm:$0xff]
          %v363 = vld [vmem:[#allocation3 + $0x10] sm:$0xff]
          %v364 = vld [vmem:[#allocation3 + $0x18] sm:$0xff]
          %v365 = vld [vmem:[#allocation3 + $0x20] sm:$0xff]
          %v366 = vld [vmem:[#allocation3 + $0x28] sm:$0xff]
          %v367 = vld [vmem:[#allocation3 + $0x30] sm:$0xff]
          %v368 = vld [vmem:[#allocation3 + $0x38] sm:$0xff]
          %v369 = vld [vmem:[%s1] sm:$0xf]
          %v370 = vld [vmem:[%s2] sm:$0xff]
          %v371 = vld [vmem:[%s2 + $0x8] sm:$0xff]
          %v372 = vld [vmem:[%s2 + $0x10] sm:$0xff]
          %v373 = vld [vmem:[%s2 + $0x18] sm:$0xff]
          %v374 = vld [vmem:[%s2 + $0x20] sm:$0xff]
          %v375 = vld [vmem:[%s2 + $0x28] sm:$0xff]
          %v376 = vld [vmem:[%s2 + $0x30] sm:$0xff]
          %v377 = vld [vmem:[%s2 + $0x38] sm:$0xff]
          %vm378 = vcmask 523264
          %v380 = vsel %vm378, %v369, 0
          %382 = vmatprep.subr.mxu0 0.0
          %383 = vmatpush1.msra.mxu0 %v353
          %384 = vmatprep.subr.mxu0 0.0
          %385 = vmatpush1.msra.mxu0 %v354
          %386 = vmatprep.subr.mxu0 0.0
          %387 = vmatpush1.msra.mxu0 %v355
          %388 = vmatprep.subr.mxu0 0.0
          %389 = vmatpush1.msra.mxu0 %v356
          %390 = vmatprep.subr.mxu0 0.0
          %391 = vmatpush1.msra.mxu0 %v357
          %392 = vmatprep.subr.mxu0 0.0
          %393 = vmatpush1.msra.mxu0 %v358
          %394 = vmatprep.subr.mxu0 0.0
          %395 = vmatpush1.msra.mxu0 %v359
          %396 = vmatprep.subr.mxu0 0.0
          %397 = vmatpush1.msra.mxu0 %v360
          %398 = vmatprep.subr.mxu0 0.0
          %399 = vmatpush1.msra.mxu0 0.0
          %400 = vmatprep.subr.mxu0 0.0
          %401 = vmatpush1.msra.mxu0 0.0
          %402 = vmatprep.subr.mxu0 0.0
          %403 = vmatpush1.msra.mxu0 0.0
          %404 = vmatprep.subr.mxu0 0.0
          %405 = vmatpush1.msra.mxu0 0.0
          %406 = vmatprep.subr.mxu0 0.0
          %407 = vmatpush1.msra.mxu0 0.0
          %408 = vmatprep.subr.mxu0 0.0
          %409 = vmatpush1.msra.mxu0 0.0
          %410 = vmatprep.subr.mxu0 0.0
          %411 = vmatpush1.msra.mxu0 0.0
          %412 = vmatprep.subr.mxu0 0.0
          %413 = vmatpush1.msra.mxu0 0.0
          %414 = vmatprep.subr.mxu0 0.0
          %415 = vmatpush1.msra.mxu0 0.0
          %416 = vmatprep.subr.mxu0 0.0
          %417 = vmatpush1.msra.mxu0 0.0
          %418 = vmatprep.subr.mxu0 0.0
          %419 = vmatpush1.msra.mxu0 0.0
          %420 = vmatprep.subr.mxu0 0.0
          %421 = vmatpush1.msra.mxu0 0.0
          %422 = vmatprep.subr.mxu0 0.0
          %423 = vmatpush1.msra.mxu0 0.0
          %424 = vmatprep.subr.mxu0 0.0
          %425 = vmatpush1.msra.mxu0 0.0
          %426 = vmatprep.subr.mxu0 0.0
          %427 = vmatpush1.msra.mxu0 0.0
          %428 = vmatprep.subr.mxu0 0.0
          %429 = vmatpush1.msra.mxu0 0.0
          %430 = vmatprep.subr.mxu0 0.0
          %431 = vmatpush1.msra.mxu0 0.0
          %432 = vmatprep.subr.mxu0 0.0
          %433 = vmatpush1.msra.mxu0 0.0
          %434 = vmatprep.subr.mxu0 0.0
          %435 = vmatpush1.msra.mxu0 0.0
          %436 = vmatprep.subr.mxu0 0.0
          %437 = vmatpush1.msra.mxu0 0.0
          %438 = vmatprep.subr.mxu0 0.0
          %439 = vmatpush1.msra.mxu0 0.0
          %440 = vmatprep.subr.mxu0 0.0
          %441 = vmatpush1.msra.mxu0 0.0
          %442 = vmatprep.subr.mxu0 0.0
          %443 = vmatpush1.msra.mxu0 0.0
          %444 = vmatprep.subr.mxu0 0.0
          %445 = vmatpush1.msra.mxu0 0.0
          %446 = vmatprep.mubr.f32.mxu0 0.0
          %447 = vmatmul.mubr.f32.gmra.mrb[0].mxu0 %v380
          %v448 = vpop.f32.mrb[0].mxu0
          %v449 = vadd.f32 0.0, %v448
          %v450 = vpop.f32.mrb[0].mxu0
          %451 = vdwg.mxu0
          %v452 = vmax.f32 %v449, 0.0
          %453 = vmatprep.subr.mxu0 0.0
          %454 = vmatpush1.msra.mxu0 %v361
          %455 = vmatprep.subr.mxu0 0.0
          %456 = vmatpush1.msra.mxu0 %v362
          %457 = vmatprep.subr.mxu0 0.0
          %458 = vmatpush1.msra.mxu0 %v363
          %459 = vmatprep.subr.mxu0 0.0
          %460 = vmatpush1.msra.mxu0 %v364
          %461 = vmatprep.subr.mxu0 0.0
          %462 = vmatpush1.msra.mxu0 %v365
          %463 = vmatprep.subr.mxu0 0.0
          %464 = vmatpush1.msra.mxu0 %v366
          %465 = vmatprep.subr.mxu0 0.0
          %466 = vmatpush1.msra.mxu0 %v367
          %467 = vmatprep.subr.mxu0 0.0
          %468 = vmatpush1.msra.mxu0 %v368
          %469 = vmatprep.subr.mxu0 0.0
          %470 = vmatpush1.msra.mxu0 0.0
          %471 = vmatprep.subr.mxu0 0.0
          %472 = vmatpush1.msra.mxu0 0.0
          %473 = vmatprep.subr.mxu0 0.0
          %474 = vmatpush1.msra.mxu0 0.0
          %475 = vmatprep.subr.mxu0 0.0
          %476 = vmatpush1.msra.mxu0 0.0
          %477 = vmatprep.subr.mxu0 0.0
          %478 = vmatpush1.msra.mxu0 0.0
          %479 = vmatprep.subr.mxu0 0.0
          %480 = vmatpush1.msra.mxu0 0.0
          %481 = vmatprep.subr.mxu0 0.0
          %482 = vmatpush1.msra.mxu0 0.0
          %483 = vmatprep.subr.mxu0 0.0
          %484 = vmatpush1.msra.mxu0 0.0
          %485 = vmatprep.subr.mxu0 0.0
          %486 = vmatpush1.msra.mxu0 0.0
          %487 = vmatprep.subr.mxu0 0.0
          %488 = vmatpush1.msra.mxu0 0.0
          %489 = vmatprep.subr.mxu0 0.0
          %490 = vmatpush1.msra.mxu0 0.0
          %491 = vmatprep.subr.mxu0 0.0
          %492 = vmatpush1.msra.mxu0 0.0
          %493 = vmatprep.subr.mxu0 0.0
          %494 = vmatpush1.msra.mxu0 0.0
          %495 = vmatprep.subr.mxu0 0.0
          %496 = vmatpush1.msra.mxu0 0.0
          %497 = vmatprep.subr.mxu0 0.0
          %498 = vmatpush1.msra.mxu0 0.0
          %499 = vmatprep.subr.mxu0 0.0
          %500 = vmatpush1.msra.mxu0 0.0
          %501 = vmatprep.subr.mxu0 0.0
          %502 = vmatpush1.msra.mxu0 0.0
          %503 = vmatprep.subr.mxu0 0.0
          %504 = vmatpush1.msra.mxu0 0.0
          %505 = vmatprep.subr.mxu0 0.0
          %506 = vmatpush1.msra.mxu0 0.0
          %507 = vmatprep.subr.mxu0 0.0
          %508 = vmatpush1.msra.mxu0 0.0
          %509 = vmatprep.subr.mxu0 0.0
          %510 = vmatpush1.msra.mxu0 0.0
          %511 = vmatprep.subr.mxu0 0.0
          %512 = vmatpush1.msra.mxu0 0.0
          %513 = vmatprep.subr.mxu0 0.0
          %514 = vmatpush1.msra.mxu0 0.0
          %515 = vmatprep.subr.mxu0 0.0
          %516 = vmatpush1.msra.mxu0 0.0
          %517 = vmatprep.mubr.f32.mxu0 0.0
          %518 = vmatmul.mubr.f32.gmra.mrb[0].mxu0 %v380
          %v519 = vpop.f32.mrb[0].mxu0
          %v520 = vadd.f32 0.0, %v519
          %v521 = vpop.f32.mrb[0].mxu0
          %522 = vdwg.mxu0
          %v523 = vmax.f32 %v520, 0.0
          %v524 = vadd.f32 %v452, %v523
          %vm525 = vcmask 31744
          %v527 = vsel %vm525, %v370, 0
          %v530 = vsel %vm525, %v371, 0
          %v533 = vsel %vm525, %v372, 0
          %v536 = vsel %vm525, %v373, 0
          %v539 = vsel %vm525, %v374, 0
          %v542 = vsel %vm525, %v375, 0
          %v545 = vsel %vm525, %v376, 0
          %v548 = vsel %vm525, %v377, 0
          %vm550 = vcmask 1043456
          %v552 = vsel %vm550, %v524, 0
          %554 = vmatprep.subr.mxu0 0.0
          %555 = vmatpush1.msra.mxu0 %v552
          %556 = vmatprep.subr.mxu0 0.0
          %557 = vmatpush1.msra.mxu0 0.0
          %558 = vmatprep.subr.mxu0 0.0
          %559 = vmatpush1.msra.mxu0 0.0
          %560 = vmatprep.subr.mxu0 0.0
          %561 = vmatpush1.msra.mxu0 0.0
          %562 = vmatprep.subr.mxu0 0.0
          %563 = vmatpush1.msra.mxu0 0.0
          %564 = vmatprep.subr.mxu0 0.0
          %565 = vmatpush1.msra.mxu0 0.0
          %566 = vmatprep.subr.mxu0 0.0
          %567 = vmatpush1.msra.mxu0 0.0
          %568 = vmatprep.subr.mxu0 0.0
          %569 = vmatpush1.msra.mxu0 0.0
          %570 = vmatprep.subr.mxu0 0.0
          %571 = vmatpush1.msra.mxu0 0.0
          %572 = vmatprep.subr.mxu0 0.0
          %573 = vmatpush1.msra.mxu0 0.0
          %574 = vmatprep.subr.mxu0 0.0
          %575 = vmatpush1.msra.mxu0 0.0
          %576 = vmatprep.subr.mxu0 0.0
          %577 = vmatpush1.msra.mxu0 0.0
          %578 = vmatprep.subr.mxu0 0.0
          %579 = vmatpush1.msra.mxu0 0.0
          %580 = vmatprep.subr.mxu0 0.0
          %581 = vmatpush1.msra.mxu0 0.0
          %582 = vmatprep.subr.mxu0 0.0
          %583 = vmatpush1.msra.mxu0 0.0
          %584 = vmatprep.subr.mxu0 0.0
          %585 = vmatpush1.msra.mxu0 0.0
          %586 = vmatprep.subr.mxu0 0.0
          %587 = vmatpush1.msra.mxu0 0.0
          %588 = vmatprep.subr.mxu0 0.0
          %589 = vmatpush1.msra.mxu0 0.0
          %590 = vmatprep.subr.mxu0 0.0
          %591 = vmatpush1.msra.mxu0 0.0
          %592 = vmatprep.subr.mxu0 0.0
          %593 = vmatpush1.msra.mxu0 0.0
          %594 = vmatprep.subr.mxu0 0.0
          %595 = vmatpush1.msra.mxu0 0.0
          %596 = vmatprep.subr.mxu0 0.0
          %597 = vmatpush1.msra.mxu0 0.0
          %598 = vmatprep.subr.mxu0 0.0
          %599 = vmatpush1.msra.mxu0 0.0
          %600 = vmatprep.subr.mxu0 0.0
          %601 = vmatpush1.msra.mxu0 0.0
          %602 = vmatprep.subr.mxu0 0.0
          %603 = vmatpush1.msra.mxu0 0.0
          %604 = vmatprep.subr.mxu0 0.0
          %605 = vmatpush1.msra.mxu0 0.0
          %606 = vmatprep.subr.mxu0 0.0
          %607 = vmatpush1.msra.mxu0 0.0
          %608 = vmatprep.subr.mxu0 0.0
          %609 = vmatpush1.msra.mxu0 0.0
          %610 = vmatprep.subr.mxu0 0.0
          %611 = vmatpush1.msra.mxu0 0.0
          %612 = vmatprep.subr.mxu0 0.0
          %613 = vmatpush1.msra.mxu0 0.0
          %614 = vmatprep.subr.mxu0 0.0
          %615 = vmatpush1.msra.mxu0 0.0
          %616 = vmatprep.subr.mxu0 0.0
          %617 = vmatpush1.msra.mxu0 0.0
          %618 = vmatprep.mubr.f32.mxu0 0.0
          %619 = vmatmul.mubr.f32.gmra.mrb[0].mxu0 %v527
          %v620 = vpop.f32.mrb[0].mxu0
          %v621 = vadd.f32 0.0, %v620
          %v622 = vpop.f32.mrb[0].mxu0
          %623 = vmatprep.mubr.f32.mxu0 0.0
          %624 = vmatmul.mubr.f32.gmra.mrb[0].mxu0 %v530
          %v625 = vpop.f32.mrb[0].mxu0
          %v626 = vadd.f32 0.0, %v625
          %v627 = vpop.f32.mrb[0].mxu0
          %628 = vmatprep.mubr.f32.mxu0 0.0
          %629 = vmatmul.mubr.f32.gmra.mrb[0].mxu0 %v533
          %v630 = vpop.f32.mrb[0].mxu0
          %v631 = vadd.f32 0.0, %v630
          %v632 = vpop.f32.mrb[0].mxu0
          %633 = vmatprep.mubr.f32.mxu0 0.0
          %634 = vmatmul.mubr.f32.gmra.mrb[0].mxu0 %v536
          %v635 = vpop.f32.mrb[0].mxu0
          %v636 = vadd.f32 0.0, %v635
          %v637 = vpop.f32.mrb[0].mxu0
          %638 = vmatprep.mubr.f32.mxu0 0.0
          %639 = vmatmul.mubr.f32.gmra.mrb[0].mxu0 %v539
          %v640 = vpop.f32.mrb[0].mxu0
          %v641 = vadd.f32 0.0, %v640
          %v642 = vpop.f32.mrb[0].mxu0
          %643 = vmatprep.mubr.f32.mxu0 0.0
          %644 = vmatmul.mubr.f32.gmra.mrb[0].mxu0 %v542
          %v645 = vpop.f32.mrb[0].mxu0
          %v646 = vadd.f32 0.0, %v645
          %v647 = vpop.f32.mrb[0].mxu0
          %648 = vmatprep.mubr.f32.mxu0 0.0
          %649 = vmatmul.mubr.f32.gmra.mrb[0].mxu0 %v545
          %v650 = vpop.f32.mrb[0].mxu0
          %v651 = vadd.f32 0.0, %v650
          %v652 = vpop.f32.mrb[0].mxu0
          %653 = vmatprep.mubr.f32.mxu0 0.0
          %654 = vmatmul.mubr.f32.gmra.mrb[0].mxu0 %v548
          %v655 = vpop.f32.mrb[0].mxu0
          %v656 = vadd.f32 0.0, %v655
          %v657 = vpop.f32.mrb[0].mxu0
          %658 = vdwg.mxu0
          %v659 = vsub.f32 0.0, %v621
          %v660 = vsub.f32 0.0, %v626
          %v661 = vsub.f32 0.0, %v631
          %v662 = vsub.f32 0.0, %v636
          %v663 = vsub.f32 0.0, %v641
          %v664 = vsub.f32 0.0, %v646
          %v665 = vsub.f32 0.0, %v651
          %v666 = vsub.f32 0.0, %v656
          %v667 = vmul.f32 %v659, 1.442695
          %v668 = vpow.pop %v667
          %v669 = vmul.f32 %v660, 1.442695
          %v670 = vpow.pop %v669
          %v671 = vmul.f32 %v661, 1.442695
          %v672 = vpow.pop %v671
          %v673 = vmul.f32 %v662, 1.442695
          %v674 = vpow.pop %v673
          %v675 = vmul.f32 %v663, 1.442695
          %v676 = vpow.pop %v675
          %v677 = vmul.f32 %v664, 1.442695
          %v678 = vpow.pop %v677
          %v679 = vmul.f32 %v665, 1.442695
          %v680 = vpow.pop %v679
          %v681 = vmul.f32 %v666, 1.442695
          %v682 = vpow.pop %v681
          %v683 = vadd.f32 %v668, 1.0
          %v684 = vadd.f32 %v670, 1.0
          %v685 = vadd.f32 %v672, 1.0
          %v686 = vadd.f32 %v674, 1.0
          %v687 = vadd.f32 %v676, 1.0
          %v688 = vadd.f32 %v678, 1.0
          %v689 = vadd.f32 %v680, 1.0
          %v690 = vadd.f32 %v682, 1.0
          %v691 = vrcp.pop %v683
          %v692 = vmul.f32 1.0, %v691
          %v693 = vrcp.pop %v684
          %v694 = vmul.f32 1.0, %v693
          %v695 = vrcp.pop %v685
          %v696 = vmul.f32 1.0, %v695
          %v697 = vrcp.pop %v686
          %v698 = vmul.f32 1.0, %v697
          %v699 = vrcp.pop %v687
          %v700 = vmul.f32 1.0, %v699
          %v701 = vrcp.pop %v688
          %v702 = vmul.f32 1.0, %v701
          %v703 = vrcp.pop %v689
          %v704 = vmul.f32 1.0, %v703
          %v705 = vrcp.pop %v690
          %v706 = vmul.f32 1.0, %v705
          %707 = vst.msk [vmem:[%s207] sm:$0xff] %vm285, %v692
          %708 = vst.msk [vmem:[%s207 + $0x8] sm:$0xff] %vm285, %v694
          %709 = vst.msk [vmem:[%s207 + $0x10] sm:$0xff] %vm285, %v696
          %710 = vst.msk [vmem:[%s207 + $0x18] sm:$0xff] %vm285, %v698
          %711 = vst.msk [vmem:[%s207 + $0x20] sm:$0xff] %vm285, %v700
          %712 = vst.msk [vmem:[%s207 + $0x28] sm:$0xff] %vm285, %v702
          %713 = vst.msk [vmem:[%s207 + $0x30] sm:$0xff] %vm285, %v704
          %714 = vst.msk [vmem:[%s207 + $0x38] sm:$0xff] %vm285, %v706
        $region44: #{tpu_custom_call.1} parent=31 // pred_fallthru
          _
        %p715 = scmp.lt.s32.totalorder %s21, 1
        %s716 = scalar_select %p715, %s21, 1
        %s717 = smul.addr %s716, 8
        %s718 = smul.addr %s717, 8
        %s719 = scalar_lea.vmem %s3, %s718
        // Predicated region
        $region45: #{tpu_custom_call.1} parent=31 // pred_check
          %p720 = pneg %p117
        $region46: #{tpu_custom_call.1} parent=31 // pred_check_branch
          %722 = sbr.rel (%p720) target = $region48
        $region47: #{tpu_custom_call.1} parent=31 // pred_region
          _
        $region48: #{tpu_custom_call.1} parent=31 // pred_fallthru
          _
      $region32: #{tpu_custom_call.1} parent=5 // pred_fallthru
        _
      %p723 = scmp.le.s32.totalorder 2, %s12
      // Predicated region
      $region49: #{tpu_custom_call.1} parent=5 // pred_check
        %p724 = pneg %p723
      $region50: #{tpu_custom_call.1} parent=5 // pred_check_branch
        %726 = sbr.rel (%p724) target = $region52
      $region51: #{tpu_custom_call.1} parent=5 // pred_region
        %s727 = ssub.s32 %s12, 2
        // Predicated region
        $region53: #{tpu_custom_call.1} parent=51 // pred_check
          %p728 = pneg %p123
        $region54: #{tpu_custom_call.1} parent=51 // pred_check_branch
          %730 = sbr.rel (%p728) target = $region56
        $region55: #{tpu_custom_call.1} parent=51 // pred_region
          %p731 = scmp.lt.s32.totalorder %s23, 1
          %s732 = scalar_select %p731, %s23, 1
          %s733 = smul.addr %s732, 8
          %s734 = smul.addr %s733, 8
          %s735 = scalar_lea.vmem %s3, %s734
        $region56: #{tpu_custom_call.1} parent=51 // pred_fallthru
          _
      $region52: #{tpu_custom_call.1} parent=5 // pred_fallthru
        _
    $region6: #{tpu_custom_call.1} parent=1 // loop_footer
      %s16 = sadd.s32 1, %s12
    $region7: #{tpu_custom_call.1} parent=1 // loop_footer_branch
      %11 = sbr.rel target = $region3
    $region8: #{tpu_custom_call.1} parent=1 // loop_exit
      _
    %736 = vsyncpa [#allocation5], 1
    %s737 = scalar_lea.sflag [#allocation5], 1
    %738 = vsyncpa %s737, 1

</llo_original>
